<compile_context>
chip_gen: v5e
topology: v5e:2x2
jax: 0.10.0
libtpu: 0.0.40
codegen_flags: <defaults>
</compile_context>

<pallas_src>
import jax
import jax.numpy as jnp
from jax.experimental import pallas as pl
from jax.experimental.pallas import tpu as pltpu

VERY_BIG_NUMBER = 1e30
VERY_NEGATIVE_NUMBER = -VERY_BIG_NUMBER


def dag_attention_kernel(mask_ref, leaves_ref, anc_ref,
                         w1l_ref, w1a_ref, b1_ref, w2_ref,
                         out_ref):
    TB, N, D = leaves_ref.shape
    A = w1l_ref.shape[1]

    mask = mask_ref[...]                         # (TB, N)  float32
    mask3 = mask.reshape(TB, N, 1)               # per-(b,n) scalar for broadcasting

    lm = (leaves_ref[...] * mask3).reshape(TB * N, D)   # leaves * mask, flattened
    am3 = anc_ref[...] * mask3                          # (TB, N, D), reused below
    am = am3.reshape(TB * N, D)

    # linear1 on concat([lm, am]) == lm @ W1_left + am @ W1_right.
    # One (TB*N, D) @ (D, A) MXU matmul per half; optional bf16 operands,
    # f32 accumulation (wdt == f32 makes the casts no-ops).
    wdt = w1l_ref.dtype
    h = (jnp.dot(lm.astype(wdt), w1l_ref[...], preferred_element_type=jnp.float32)
         + jnp.dot(am.astype(wdt), w1a_ref[...], preferred_element_type=jnp.float32)
         + b1_ref[...])                          # (TB*N, A) f32
    h = jnp.maximum(h, 0.0)                      # relu

    # linear2 as a VPU multiply + lane (XLU) reduction instead of an (A,1) matmul.
    logits = jnp.sum(h.reshape(TB, N, A) * w2_ref[...], axis=-1)   # (TB, N)
    # NOTE: b2 is intentionally omitted — softmax(x + c) == softmax(x).

    logits = logits + (1.0 - mask) * VERY_NEGATIVE_NUMBER

    # masked softmax over the ancestor axis N (lane axis of the (TB, N) tile)
    m = jnp.max(logits, axis=-1, keepdims=True)        # (TB, 1)
    e = jnp.exp(logits - m)                            # (TB, N)
    denom = jnp.sum(e, axis=-1, keepdims=True)         # (TB, 1)
    attn = e * pl.reciprocal(denom, approx=True)       # (TB, N), EUP reciprocal

    # out[b, d] = sum_n attn[b, n] * (ancestors * mask)[b, n, d]
    out_ref[...] = jnp.sum(attn.reshape(TB, N, 1) * am3, axis=1).astype(out_ref.dtype)


def _choose_tb(B, N, D, A, itemsize=4, vmem_budget_bytes=8 << 20):
    """Pick the batch-block size: enough rows (TB*N >= 128) to fill MXU sublanes,
    bounded by a conservative VMEM budget (safe even on v7x's 64 MiB VMEM)."""
    tb = max(1, pl.cdiv(128, N))
    # rough per-batch-element VMEM: double-buffered leaves/anc/mask + h + output
    per_b = 2 * (2 * N * D + N) * itemsize + N * A * 4 + 2 * D * 4
    tb = min(tb, max(1, vmem_budget_bytes // per_b))
    if tb >= B:
        return B                       # full-batch block (block dim == array dim)
    return max(8, (tb // 8) * 8)       # multiple of 8 keeps (8,128) sublane tiling


def dag_attention_2d(leaves, ancestors, mask, w1, b1, w2, b2, *, matmul_dtype=None):
    """leaves, ancestors: (B, N, D); mask: (B, N); w1: (A, 2D); b1: (A,);
    w2: (1, A); b2: (1,).  Returns (B, D) — same as DAGAttention2D.forward."""
    B, N, D = leaves.shape
    A = w1.shape[0]

    w1t = jnp.transpose(w1)            # (2D, A), so the kernel does x @ W
    w1l = w1t[:D]                      # (D, A) half applied to leaves
    w1a = w1t[D:]                      # (D, A) half applied to ancestors
    if matmul_dtype is not None:       # bf16 operands on v6e/v7x; f32 accumulate
        w1l = w1l.astype(matmul_dtype)
        w1a = w1a.astype(matmul_dtype)
    b1r = b1.reshape(1, A).astype(jnp.float32)
    w2row = w2.reshape(1, A).astype(jnp.float32)
    del b2                             # softmax is shift-invariant: b2 has no effect
    mask2 = mask.astype(leaves.dtype)  # lane-dense (B, N) mask input

    TB = _choose_tb(B, N, D, A)
    grid = (pl.cdiv(B, TB),)

    out = pl.pallas_call(
        dag_attention_kernel,
        out_shape=jax.ShapeDtypeStruct((B, D), leaves.dtype),
        grid=grid,
        in_specs=[
            pl.BlockSpec((TB, N), lambda b: (b, 0)),        # mask
            pl.BlockSpec((TB, N, D), lambda b: (b, 0, 0)),  # leaves
            pl.BlockSpec((TB, N, D), lambda b: (b, 0, 0)),  # ancestors
            pl.BlockSpec((D, A), lambda b: (0, 0)),         # W1 left half
            pl.BlockSpec((D, A), lambda b: (0, 0)),         # W1 right half
            pl.BlockSpec((1, A), lambda b: (0, 0)),         # b1
            pl.BlockSpec((1, A), lambda b: (0, 0)),         # w2 row
        ],
        out_specs=pl.BlockSpec((TB, D), lambda b: (b, 0)),  # lane-dense output
        compiler_params=pltpu.CompilerParams(
            dimension_semantics=("parallel",),              # batch axis is independent
            vmem_limit_bytes=32 * 1024 * 1024),
    )(mask2, leaves, ancestors, w1l, w1a, b1r, w2row)
    return out


if __name__ == "__main__":
    key = jax.random.PRNGKey(0)
    B, N, D, A = 2, 8, 16, 32        # batch, num ancestors, feature dim, attn dim
    in_features = 2 * D              # concat(leaves, ancestors)

    k1, k2, k3, k4, k5, k6 = jax.random.split(key, 6)
    leaves = jax.random.normal(k1, (B, N, D), dtype=jnp.float32)
    ancestors = jax.random.normal(k2, (B, N, D), dtype=jnp.float32)
    lens = jnp.array([5, 8])         # valid ancestor counts per batch element
    mask = (jnp.arange(N)[None, :] < lens[:, None]).astype(jnp.float32)

    # deterministic "linear1"/"linear2" parameters (PyTorch Linear: W (out,in), b (out,))
    w1 = 0.1 * jax.random.normal(k3, (A, in_features), dtype=jnp.float32)
    b1 = 0.1 * jax.random.normal(k4, (A,), dtype=jnp.float32)
    w2 = 0.1 * jax.random.normal(k5, (1, A), dtype=jnp.float32)
    b2 = 0.1 * jax.random.normal(k6, (1,), dtype=jnp.float32)

    out = dag_attention_2d(leaves, ancestors, mask, w1, b1, w2, b2)
    out = jax.block_until_ready(out)

    # pure-JAX reference of the PyTorch forward (b2 included; softmax is shift-invariant)
    mask3 = mask[:, :, None]
    x = jnp.concatenate([leaves * mask3, ancestors * mask3], axis=-1)
    h = jnp.maximum(x @ w1.T + b1, 0.0)
    logits = h @ w2.T + b2 + (1.0 - mask3) * VERY_NEGATIVE_NUMBER
    attn = jax.nn.softmax(logits, axis=1)
    ref = jnp.sum(attn * ancestors * mask3, axis=1)

    assert out.shape == (B, D)
    # tolerance slightly loosened for the approximate EUP reciprocal in the softmax denom
    assert jnp.allclose(out, ref, atol=1e-3, rtol=1e-2), (out, ref)
    print("KERNEL_OK")
</pallas_src>

<mosaic_0001>
module attributes {stable_mosaic.version = 11 : i64} {
  func.func @dag_attention_kernel(%arg0: i32, %arg1: memref<2x8xf32, #tpu.memory_space<vmem>>, %arg2: memref<2x8x16xf32, #tpu.memory_space<vmem>>, %arg3: memref<2x8x16xf32, #tpu.memory_space<vmem>>, %arg4: memref<16x32xf32, #tpu.memory_space<vmem>>, %arg5: memref<16x32xf32, #tpu.memory_space<vmem>>, %arg6: memref<1x32xf32, #tpu.memory_space<vmem>>, %arg7: memref<1x32xf32, #tpu.memory_space<vmem>>, %arg8: memref<2x16xf32, #tpu.memory_space<vmem>>) attributes {dimension_semantics = [#tpu.dimension_semantics<parallel>], iteration_bounds = array<i64: 1>, scalar_prefetch = 0 : i64, scratch_operands = 0 : i64, tpu.core_type = #tpu.core_type<tc>, window_params = [{transform_indices = @transform_0, window_bounds = array<i64: 2, 8>}, {transform_indices = @transform_1, window_bounds = array<i64: 2, 8, 16>}, {transform_indices = @transform_2, window_bounds = array<i64: 2, 8, 16>}, {pipeline_mode = #tpu.pipeline_mode<synchronous>, transform_indices = @transform_3, window_bounds = array<i64: 16, 32>}, {pipeline_mode = #tpu.pipeline_mode<synchronous>, transform_indices = @transform_4, window_bounds = array<i64: 16, 32>}, {pipeline_mode = #tpu.pipeline_mode<synchronous>, transform_indices = @transform_5, window_bounds = array<i64: 1, 32>}, {pipeline_mode = #tpu.pipeline_mode<synchronous>, transform_indices = @transform_6, window_bounds = array<i64: 1, 32>}, {transform_indices = @transform_7, window_bounds = array<i64: 2, 16>}]} {
    %c0 = arith.constant 0 : index
    %c0_0 = arith.constant 0 : index
    %0 = vector.load %arg1[%c0, %c0_0] : memref<2x8xf32, #tpu.memory_space<vmem>>, vector<2x8xf32>
    %1 = vector.shape_cast %0 : vector<2x8xf32> to vector<2x8x1xf32>
    %c0_1 = arith.constant 0 : index
    %c0_2 = arith.constant 0 : index
    %c0_3 = arith.constant 0 : index
    %2 = vector.load %arg2[%c0_1, %c0_2, %c0_3] : memref<2x8x16xf32, #tpu.memory_space<vmem>>, vector<2x8x16xf32>
    %3 = vector.broadcast %1 : vector<2x8x1xf32> to vector<2x8x16xf32>
    %4 = arith.mulf %2, %3 : vector<2x8x16xf32>
    %5 = vector.shape_cast %4 : vector<2x8x16xf32> to vector<16x16xf32>
    %c0_4 = arith.constant 0 : index
    %c0_5 = arith.constant 0 : index
    %c0_6 = arith.constant 0 : index
    %6 = vector.load %arg3[%c0_4, %c0_5, %c0_6] : memref<2x8x16xf32, #tpu.memory_space<vmem>>, vector<2x8x16xf32>
    %7 = vector.broadcast %1 : vector<2x8x1xf32> to vector<2x8x16xf32>
    %8 = arith.mulf %6, %7 : vector<2x8x16xf32>
    %9 = vector.shape_cast %8 : vector<2x8x16xf32> to vector<16x16xf32>
    %c0_7 = arith.constant 0 : index
    %c0_8 = arith.constant 0 : index
    %10 = vector.load %arg4[%c0_7, %c0_8] : memref<16x32xf32, #tpu.memory_space<vmem>>, vector<16x32xf32>
    %cst = arith.constant dense<0.000000e+00> : vector<16x32xf32>
    %11 = tpu.matmul %5, %10, %cst {dimension_numbers = #tpu.dot_dimension_numbers<[1], [0], [0], [1], [0, 0, 1, 1], [], []>} : vector<16x16xf32>, vector<16x32xf32>, vector<16x32xf32> -> vector<16x32xf32>
    %c0_9 = arith.constant 0 : index
    %c0_10 = arith.constant 0 : index
    %12 = vector.load %arg5[%c0_9, %c0_10] : memref<16x32xf32, #tpu.memory_space<vmem>>, vector<16x32xf32>
    %cst_11 = arith.constant dense<0.000000e+00> : vector<16x32xf32>
    %13 = tpu.matmul %9, %12, %cst_11 {dimension_numbers = #tpu.dot_dimension_numbers<[1], [0], [0], [1], [0, 0, 1, 1], [], []>} : vector<16x16xf32>, vector<16x32xf32>, vector<16x32xf32> -> vector<16x32xf32>
    %14 = arith.addf %11, %13 : vector<16x32xf32>
    %c0_12 = arith.constant 0 : index
    %c0_13 = arith.constant 0 : index
    %15 = vector.load %arg6[%c0_12, %c0_13] : memref<1x32xf32, #tpu.memory_space<vmem>>, vector<1x32xf32>
    %16 = vector.broadcast %15 : vector<1x32xf32> to vector<16x32xf32>
    %17 = arith.addf %14, %16 : vector<16x32xf32>
    %cst_14 = arith.constant 0.000000e+00 : f32
    %18 = vector.broadcast %cst_14 : f32 to vector<16x32xf32>
    %19 = arith.maximumf %17, %18 : vector<16x32xf32>
    %20 = vector.shape_cast %19 : vector<16x32xf32> to vector<2x8x32xf32>
    %c0_15 = arith.constant 0 : index
    %c0_16 = arith.constant 0 : index
    %21 = vector.load %arg7[%c0_15, %c0_16] : memref<1x32xf32, #tpu.memory_space<vmem>>, vector<1x32xf32>
    %22 = vector.shape_cast %21 : vector<1x32xf32> to vector<1x1x32xf32>
    %23 = vector.broadcast %22 : vector<1x1x32xf32> to vector<2x8x32xf32>
    %24 = arith.mulf %20, %23 : vector<2x8x32xf32>
    %cst_17 = arith.constant dense<0.000000e+00> : vector<2x8xf32>
    %25 = vector.multi_reduction <add>, %24, %cst_17 [2] : vector<2x8x32xf32> to vector<2x8xf32>
    %cst_18 = arith.constant 1.000000e+00 : f32
    %26 = vector.broadcast %cst_18 : f32 to vector<2x8xf32>
    %27 = arith.subf %26, %0 : vector<2x8xf32>
    %cst_19 = arith.constant -1.000000e+30 : f32
    %28 = vector.broadcast %cst_19 : f32 to vector<2x8xf32>
    %29 = arith.mulf %27, %28 : vector<2x8xf32>
    %30 = arith.addf %25, %29 : vector<2x8xf32>
    %cst_20 = arith.constant dense<0xFF800000> : vector<2xf32>
    %31 = vector.multi_reduction <maximumf>, %30, %cst_20 [1] : vector<2x8xf32> to vector<2xf32>
    %32 = vector.shape_cast %31 : vector<2xf32> to vector<2x1xf32>
    %33 = vector.broadcast %32 : vector<2x1xf32> to vector<2x8xf32>
    %34 = arith.subf %30, %33 : vector<2x8xf32>
    %35 = math.exp %34 : vector<2x8xf32>
    %cst_21 = arith.constant dense<0.000000e+00> : vector<2xf32>
    %36 = vector.multi_reduction <add>, %35, %cst_21 [1] : vector<2x8xf32> to vector<2xf32>
    %37 = vector.shape_cast %36 : vector<2xf32> to vector<2x1xf32>
    %38 = tpu.reciprocal %37 {approx = true} : vector<2x1xf32> -> vector<2x1xf32>
    %39 = vector.broadcast %38 : vector<2x1xf32> to vector<2x8xf32>
    %40 = arith.mulf %35, %39 : vector<2x8xf32>
    %41 = vector.shape_cast %40 : vector<2x8xf32> to vector<2x8x1xf32>
    %42 = vector.broadcast %41 : vector<2x8x1xf32> to vector<2x8x16xf32>
    %43 = arith.mulf %42, %8 : vector<2x8x16xf32>
    %cst_22 = arith.constant dense<0.000000e+00> : vector<2x16xf32>
    %44 = vector.multi_reduction <add>, %43, %cst_22 [1] : vector<2x8x16xf32> to vector<2x16xf32>
    %c0_23 = arith.constant 0 : index
    %c0_24 = arith.constant 0 : index
    %45 = vector.load %arg8[%c0_23, %c0_24] : memref<2x16xf32, #tpu.memory_space<vmem>>, vector<2x16xf32>
    tpu.vector_store %arg8[%c0_23, %c0_24], %44 {strides = array<i32>} : memref<2x16xf32, #tpu.memory_space<vmem>>, vector<2x16xf32>,
    return
  }
  func.func @transform_0(%arg0: i32) -> (i32, i32) {
    %c0_i32 = arith.constant 0 : i32
    %c0_i32_0 = arith.constant 0 : i32
    return %arg0, %c0_i32 : i32, i32
  }
  func.func @transform_1(%arg0: i32) -> (i32, i32, i32) {
    %c0_i32 = arith.constant 0 : i32
    %c0_i32_0 = arith.constant 0 : i32
    %c0_i32_1 = arith.constant 0 : i32
    return %arg0, %c0_i32, %c0_i32_0 : i32, i32, i32
  }
  func.func @transform_2(%arg0: i32) -> (i32, i32, i32) {
    %c0_i32 = arith.constant 0 : i32
    %c0_i32_0 = arith.constant 0 : i32
    %c0_i32_1 = arith.constant 0 : i32
    return %arg0, %c0_i32, %c0_i32_0 : i32, i32, i32
  }
  func.func @transform_3(%arg0: i32) -> (i32, i32) {
    %c0_i32 = arith.constant 0 : i32
    %c0_i32_0 = arith.constant 0 : i32
    %c0_i32_1 = arith.constant 0 : i32
    return %c0_i32, %c0_i32_0 : i32, i32
  }
  func.func @transform_4(%arg0: i32) -> (i32, i32) {
    %c0_i32 = arith.constant 0 : i32
    %c0_i32_0 = arith.constant 0 : i32
    %c0_i32_1 = arith.constant 0 : i32
    return %c0_i32, %c0_i32_0 : i32, i32
  }
  func.func @transform_5(%arg0: i32) -> (i32, i32) {
    %c0_i32 = arith.constant 0 : i32
    %c0_i32_0 = arith.constant 0 : i32
    %c0_i32_1 = arith.constant 0 : i32
    return %c0_i32, %c0_i32_0 : i32, i32
  }
  func.func @transform_6(%arg0: i32) -> (i32, i32) {
    %c0_i32 = arith.constant 0 : i32
    %c0_i32_0 = arith.constant 0 : i32
    %c0_i32_1 = arith.constant 0 : i32
    return %c0_i32, %c0_i32_0 : i32, i32
  }
  func.func @transform_7(%arg0: i32) -> (i32, i32) {
    %c0_i32 = arith.constant 0 : i32
    %c0_i32_0 = arith.constant 0 : i32
    return %arg0, %c0_i32 : i32, i32
  }
}

</mosaic_0001>

<llo_original>
// kernel: tpu_custom_call.1
$region0: #{tpu_custom_call.1}
  #allocation0 [shape = 'u32[]', space=smem, size = 0x4, offset = 0x4, fixed_abs, tag = 'smem constant byte address 0x4 - core index']
  #allocation1 [shape = 'u32[72,128]{1,0:T(1,128)}', space=vmem, size = 0x9000, scoped, tag = 'internal scratch']
  %s0 = inlined_call_operand.hbm [shape: f32[2,8], index: 0, kind: input, shape index: {}]
  %s1 = inlined_call_operand.hbm [shape: f32[2,8,16], index: 1, kind: input, shape index: {}]
  %s2 = inlined_call_operand.hbm [shape: f32[2,8,16], index: 2, kind: input, shape index: {}]
  %s3 = inlined_call_operand.hbm [shape: f32[16,32], index: 3, kind: input, shape index: {}]
  %s4 = inlined_call_operand.hbm [shape: f32[16,32], index: 4, kind: input, shape index: {}]
  %s5 = inlined_call_operand.vmem [shape: f32[1,32], index: 5, kind: input, shape index: {}]
  %s6 = inlined_call_operand.vmem [shape: f32[1,32], index: 6, kind: input, shape index: {}]
  %s7 = inlined_call_operand.hbm [shape: f32[2,16], index: 7, kind: output, shape index: {}]
  %s8 = sld [smem:[#allocation0]]
  $region58: #{tpu_custom_call.1} parent=0
    _
  %s10 = ssub.s32 1, %s8
  %s11 = scalar_select 0, %s10, %s8
  $region1: #{tpu_custom_call.1} parent=0
    #allocation2 [shape = 'u8[1024]{0}', space=vmem, size = 0x400, scoped, tag = 'input window, operand 0, single buffered']
    #allocation3 [shape = 's32[1]{0}', space=sflag, size = 0x4, scoped, tag = 'scoped memory for tpu_custom_call.1']
    #allocation4 [shape = 's32[1]{0}', space=sflag, size = 0x4, scoped, tag = 'scoped memory for tpu_custom_call.1']
    #allocation5 [shape = 'u8[8192]{0}', space=vmem, size = 0x2000, scoped, tag = 'input window, operand 1, single buffered']
    #allocation6 [shape = 's32[1]{0}', space=sflag, size = 0x4, scoped, tag = 'scoped memory for tpu_custom_call.1']
    #allocation7 [shape = 'u8[8192]{0}', space=vmem, size = 0x2000, scoped, tag = 'input window, operand 2, single buffered']
    #allocation8 [shape = 'u8[8192]{0}', space=vmem, size = 0x2000, scoped, tag = 'input window, operand 3, single buffered']
    #allocation9 [shape = 's32[1]{0}', space=sflag, size = 0x4, scoped, tag = 'scoped memory for tpu_custom_call.1']
    #allocation10 [shape = 'u8[8192]{0}', space=vmem, size = 0x2000, scoped, tag = 'input window, operand 4, single buffered']
    #allocation11 [shape = 'u8[1024]{0}', space=vmem, size = 0x400, scoped, tag = 'output window, operand 0, single buffered']
    %12 = vsyncpa [#allocation3], 0
    %13 = vsyncpa [#allocation6], 0
    %14 = vsyncpa [#allocation9], 0
    %15 = vsyncpa [#allocation4], 0
    // Predicated region
    $region2: #{tpu_custom_call.1} parent=1 // pred_check
      _
    $region3: #{tpu_custom_call.1} parent=1 // pred_check_branch
      %17 = sbr.rel (0) target = $region5
    $region4: #{tpu_custom_call.1} parent=1 // pred_region
      %19 = vsyncadd [#allocation3], 0
      %s21 = sshll.u32 %s0, 4
      %s22 = int_to_ptr.hbm [resolvable:$true] %s21
      %s23 = sshll.u32 [#allocation2], 4
      %s24 = int_to_ptr.vmem [resolvable:$true] %s23
      %26 = dma.hbm_to_vmem [thread:$0]  %s22, 32, %s24, [#allocation3]
    $region5: #{tpu_custom_call.1} parent=1 // pred_fallthru
      _
    // Predicated region
    $region6: #{tpu_custom_call.1} parent=1 // pred_check
      _
    $region7: #{tpu_custom_call.1} parent=1 // pred_check_branch
      %28 = sbr.rel (0) target = $region9
    $region8: #{tpu_custom_call.1} parent=1 // pred_region
      %30 = vsyncadd [#allocation6], 0
      %s31 = sshll.u32 %s1, 4
      %s32 = int_to_ptr.hbm [resolvable:$true] %s31
      %s33 = sshll.u32 [#allocation5], 4
      %s34 = int_to_ptr.vmem [resolvable:$true] %s33
      %39 = dma.hbm_to_vmem [thread:$0]  %s32, 256, %s34, [#allocation6], 128, 128, 8
    $region9: #{tpu_custom_call.1} parent=1 // pred_fallthru
      _
    // Predicated region
    $region10: #{tpu_custom_call.1} parent=1 // pred_check
      _
    $region11: #{tpu_custom_call.1} parent=1 // pred_check_branch
      %41 = sbr.rel (0) target = $region13
    $region12: #{tpu_custom_call.1} parent=1 // pred_region
      %43 = vsyncadd [#allocation6], 0
      %s44 = sshll.u32 %s2, 4
      %s45 = int_to_ptr.hbm [resolvable:$true] %s44
      %s46 = sshll.u32 [#allocation7], 4
      %s47 = int_to_ptr.vmem [resolvable:$true] %s46
      %52 = dma.hbm_to_vmem [thread:$0]  %s45, 256, %s47, [#allocation6], 128, 128, 8
    $region13: #{tpu_custom_call.1} parent=1 // pred_fallthru
      _
    // Predicated region
    $region14: #{tpu_custom_call.1} parent=1 // pred_check
      _
    $region15: #{tpu_custom_call.1} parent=1 // pred_check_branch
      %54 = sbr.rel (0) target = $region17
    $region16: #{tpu_custom_call.1} parent=1 // pred_region
      %56 = vsyncadd [#allocation9], 0
      %s57 = sshll.u32 %s3, 4
      %s58 = int_to_ptr.hbm [resolvable:$true] %s57
      %s59 = sshll.u32 [#allocation8], 4
      %s60 = int_to_ptr.vmem [resolvable:$true] %s59
      %65 = dma.hbm_to_vmem [thread:$0]  %s58, 256, %s60, [#allocation9], 128, 128, 8
    $region17: #{tpu_custom_call.1} parent=1 // pred_fallthru
      _
    // Predicated region
    $region18: #{tpu_custom_call.1} parent=1 // pred_check
      _
    $region19: #{tpu_custom_call.1} parent=1 // pred_check_branch
      %67 = sbr.rel (0) target = $region21
    $region20: #{tpu_custom_call.1} parent=1 // pred_region
      %69 = vsyncadd [#allocation9], 0
      %s70 = sshll.u32 %s4, 4
      %s71 = int_to_ptr.hbm [resolvable:$true] %s70
      %s72 = sshll.u32 [#allocation10], 4
      %s73 = int_to_ptr.vmem [resolvable:$true] %s72
      %78 = dma.hbm_to_vmem [thread:$0]  %s71, 256, %s73, [#allocation9], 128, 128, 8
    $region21: #{tpu_custom_call.1} parent=1 // pred_fallthru
      _
    // Predicated region
    $region22: #{tpu_custom_call.1} parent=1 // pred_check
      _
    $region23: #{tpu_custom_call.1} parent=1 // pred_check_branch
      %80 = sbr.rel (0) target = $region25
    $region24: #{tpu_custom_call.1} parent=1 // pred_region
      _
    $region25: #{tpu_custom_call.1} parent=1 // pred_fallthru
      _
    // Predicated region
    $region26: #{tpu_custom_call.1} parent=1 // pred_check
      _
    $region27: #{tpu_custom_call.1} parent=1 // pred_check_branch
      %82 = sbr.rel (0) target = $region29
    $region28: #{tpu_custom_call.1} parent=1 // pred_region
      _
    $region29: #{tpu_custom_call.1} parent=1 // pred_fallthru
      _
    // Predicated region
    $region30: #{tpu_custom_call.1} parent=1 // pred_check
      _
    $region31: #{tpu_custom_call.1} parent=1 // pred_check_branch
      %84 = sbr.rel (0) target = $region33
    $region32: #{tpu_custom_call.1} parent=1 // pred_region
      %86 = dma.done [#allocation3], 32
    $region33: #{tpu_custom_call.1} parent=1 // pred_fallthru
      _
    // Predicated region
    $region34: #{tpu_custom_call.1} parent=1 // pred_check
      _
    $region35: #{tpu_custom_call.1} parent=1 // pred_check_branch
      %88 = sbr.rel (0) target = $region37
    $region36: #{tpu_custom_call.1} parent=1 // pred_region
      %90 = dma.done [#allocation6], 256
    $region37: #{tpu_custom_call.1} parent=1 // pred_fallthru
      _
    // Predicated region
    $region38: #{tpu_custom_call.1} parent=1 // pred_check
      _
    $region39: #{tpu_custom_call.1} parent=1 // pred_check_branch
      %92 = sbr.rel (0) target = $region41
    $region40: #{tpu_custom_call.1} parent=1 // pred_region
      %94 = dma.done [#allocation6], 256
    $region41: #{tpu_custom_call.1} parent=1 // pred_fallthru
      _
    // Predicated region
    $region42: #{tpu_custom_call.1} parent=1 // pred_check
      _
    $region43: #{tpu_custom_call.1} parent=1 // pred_check_branch
      %96 = sbr.rel (0) target = $region45
    $region44: #{tpu_custom_call.1} parent=1 // pred_region
      %98 = dma.done [#allocation9], 256
    $region45: #{tpu_custom_call.1} parent=1 // pred_fallthru
      _
    // Predicated region
    $region46: #{tpu_custom_call.1} parent=1 // pred_check
      _
    $region47: #{tpu_custom_call.1} parent=1 // pred_check_branch
      %100 = sbr.rel (0) target = $region49
    $region48: #{tpu_custom_call.1} parent=1 // pred_region
      %102 = dma.done [#allocation9], 256
    $region49: #{tpu_custom_call.1} parent=1 // pred_fallthru
      _
    %v103 = vld [vmem:[#allocation2] sm:$0x3]
    %v104 = vperm.slane %v103, 0
    %v105 = vlaneseq
    %v106 = vshrl.u32 %v105, 7
    %108 = vset.pattern.permute.xlu0 %v106
    %109 = vperm.xlu0 %108, %v104
    %v110 = vpop.permute.xlu0 %109
    %v111 = vperm.slane %v103, 1
    %v112 = vlaneseq
    %v113 = vshrl.u32 %v112, 7
    %115 = vset.pattern.permute.xlu0 %v113
    %116 = vperm.xlu0 %115, %v111
    %v117 = vpop.permute.xlu0 %116
    %v118 = vld [vmem:[#allocation5] sm:$0xff]
    %v119 = vld [vmem:[#allocation5 + $0x8] sm:$0xff]
    %v120 = vmul.f32 %v118, %v110
    %v121 = vmul.f32 %v119, %v117
    %v122 = vld [vmem:[#allocation7] sm:$0xff]
    %v123 = vld [vmem:[#allocation7 + $0x8] sm:$0xff]
    %v124 = vmul.f32 %v122, %v110
    %v125 = vmul.f32 %v123, %v117
    %v126 = vld [vmem:[#allocation8] sm:$0xff]
    %v127 = vld [vmem:[#allocation8 + $0x8] sm:$0xff]
    %v128 = vld [vmem:[#allocation10] sm:$0xff]
    %v129 = vld [vmem:[#allocation10 + $0x8] sm:$0xff]
    %vm130 = vcmask 130048
    %v132 = vsel %vm130, %v124, 0
    %v135 = vsel %vm130, %v125, 0
    %137 = vmatpush.msra.mxu0 0.0
    %138 = vmatpush.msra.mxu0 0.0
    %139 = vmatpush.msra.mxu0 0.0
    %140 = vmatpush.msra.mxu0 0.0
    %141 = vmatpush.msra.mxu0 0.0
    %142 = vmatpush.msra.mxu0 0.0
    %143 = vmatpush.msra.mxu0 0.0
    %144 = vmatpush.msra.mxu0 0.0
    %145 = vmatpush.msra.mxu0 0.0
    %146 = vmatpush.msra.mxu0 0.0
    %147 = vmatpush.msra.mxu0 0.0
    %148 = vmatpush.msra.mxu0 0.0
    %149 = vmatpush.msra.mxu0 0.0
    %150 = vmatpush.msra.mxu0 0.0
    %151 = vmatpush.msra.mxu0 %v129
    %152 = vmatpush.msra.mxu0 %v128
    %153 = vmatmul.f32.gmra.mxu0 %v132
    %v154 = vpop.f32.mrf.mxu0
    %v155 = vadd.f32 0.0, %v154
    %156 = vmatmul.f32.gmra.mxu0 %v135
    %v157 = vpop.f32.mrf.mxu0
    %v158 = vadd.f32 0.0, %v157
    %159 = vdwg.mxu0
    %v161 = vsel %vm130, %v120, 0
    %v164 = vsel %vm130, %v121, 0
    %166 = vmatpush.msra.mxu0 0.0
    %167 = vmatpush.msra.mxu0 0.0
    %168 = vmatpush.msra.mxu0 0.0
    %169 = vmatpush.msra.mxu0 0.0
    %170 = vmatpush.msra.mxu0 0.0
    %171 = vmatpush.msra.mxu0 0.0
    %172 = vmatpush.msra.mxu0 0.0
    %173 = vmatpush.msra.mxu0 0.0
    %174 = vmatpush.msra.mxu0 0.0
    %175 = vmatpush.msra.mxu0 0.0
    %176 = vmatpush.msra.mxu0 0.0
    %177 = vmatpush.msra.mxu0 0.0
    %178 = vmatpush.msra.mxu0 0.0
    %179 = vmatpush.msra.mxu0 0.0
    %180 = vmatpush.msra.mxu0 %v127
    %181 = vmatpush.msra.mxu0 %v126
    %182 = vmatmul.f32.gmra.mxu0 %v161
    %v183 = vpop.f32.mrf.mxu0
    %v184 = vadd.f32 %v155, %v183
    %185 = vmatmul.f32.gmra.mxu0 %v164
    %v186 = vpop.f32.mrf.mxu0
    %v187 = vadd.f32 %v158, %v186
    %188 = vdwg.mxu0
    %v189 = vld [vmem:[%s5] sm:$0x1]
    %v191 = vperm.slane %v189, 0
    %v193 = vadd.f32 %v184, %v191
    %v194 = vadd.f32 %v187, %v191
    %v195 = vmax.f32 %v193, 0.0
    %v196 = vmax.f32 %v194, 0.0
    %v197 = vld [vmem:[%s6] sm:$0x1]
    %v199 = vperm.slane %v197, 0
    %v201 = vmul.f32 %v195, %v199
    %v202 = vmul.f32 %v196, %v199
    %vm203 = vcmask 261120
    %v204 = vsel %vm203, %v201, 0.0
    %205 = vadd.xlane.f32.xlu0 %v204
    %v206 = vpop.xlane.xlu0 %205
    %v207 = vsel %vm203, %v202, 0.0
    %208 = vadd.xlane.f32.xlu0 %v207
    %v209 = vpop.xlane.xlu0 %208
    %v210 = vsub.f32 1.0, %v103
    %v211 = vmul.f32 %v210, -1e+30
    %v213 = vperm.slane %v211, 0
    %v214 = vlaneseq
    %v215 = vshrl.u32 %v214, 7
    %217 = vset.pattern.permute.xlu0 %v215
    %218 = vperm.xlu0 %217, %v213
    %v219 = vpop.permute.xlu0 %218
    %v220 = vperm.slane %v211, 1
    %v221 = vlaneseq
    %v222 = vshrl.u32 %v221, 7
    %224 = vset.pattern.permute.xlu0 %v222
    %225 = vperm.xlu0 %224, %v220
    %v226 = vpop.permute.xlu0 %225
    %v229 = vadd.f32 %v206, %v219
    %v230 = vadd.f32 %v209, %v226
    %233 = vset.pattern.permute.xlu0 0
    %234 = vperm.xlu0 %233, %v229
    %v235 = vpop.permute.xlu0 %234
    %236 = vset.pattern.permute.xlu0 0
    %237 = vperm.xlu0 %236, %v230
    %v238 = vpop.permute.xlu0 %237
    %v239 = vlaneseq
    %v240 = vand.u32 %v239, 127
    %v241 = vperm.slane %v235, %v240
    %v242 = vperm.slane %v238, %v240
    %vm243 = vcmask 1041409
    %v244 = vsel %vm243, %v242, %v241
    %vm246 = vcmask 58368
    %v247 = vsel %vm246, %v244, -inf
    %248 = vmax.xlane.f32.xlu0 %v247
    %v249 = vpop.xlane.xlu0 %248
    %v251 = vperm.slane %v249, 0
    %v252 = vperm.slane %v249, 1
    %v255 = vsub.f32 %v229, %v251
    %v256 = vsub.f32 %v230, %v252
    %v257 = vmul.f32 %v255, 1.442695
    %v258 = vpow.pop %v257
    %v259 = vmul.f32 %v256, 1.442695
    %v260 = vpow.pop %v259
    %263 = vset.pattern.permute.xlu0 0
    %264 = vperm.xlu0 %263, %v258
    %v265 = vpop.permute.xlu0 %264
    %266 = vset.pattern.permute.xlu0 0
    %267 = vperm.xlu0 %266, %v260
    %v268 = vpop.permute.xlu0 %267
    %v269 = vperm.slane %v265, %v240
    %v270 = vperm.slane %v268, %v240
    %v271 = vsel %vm243, %v270, %v269
    %v273 = vsel %vm246, %v271, 0.0
    %274 = vadd.xlane.f32.xlu0 %v273
    %v275 = vpop.xlane.xlu0 %274
    %v276 = vrcp.pop %v275
    %v278 = vperm.slane %v276, 0
    %v279 = vperm.slane %v276, 1
    %v282 = vmul.f32 %v258, %v278
    %v283 = vmul.f32 %v260, %v279
    %285 = vset.pattern.permute.xlu0 0
    %286 = vperm.xlu0 %285, %v282
    %v287 = vpop.permute.xlu0 %286
    %290 = vset.pattern.permute.xlu0 0
    %291 = vperm.xlu0 %290, %v283
    %v292 = vpop.permute.xlu0 %291
    %v294 = vmul.f32 %v287, %v124
    %v295 = vmul.f32 %v292, %v125
    %v296 = vsel %vm130, %v294, 0.0
    %v297 = vrot.slane %v296, 4
    %v298 = vadd.f32 %v296, %v297
    %v299 = vrot.slane %v298, 2
    %v300 = vadd.f32 %v298, %v299
    %v301 = vrot.slane %v300, 1
    %v302 = vadd.f32 %v300, %v301
    %v303 = vsel %vm130, %v295, 0.0
    %v304 = vrot.slane %v303, 4
    %v305 = vadd.f32 %v303, %v304
    %v306 = vrot.slane %v305, 2
    %v307 = vadd.f32 %v305, %v306
    %v308 = vrot.slane %v307, 1
    %v309 = vadd.f32 %v307, %v308
    %v312 = vsel %vm243, %v309, %v302
    %vm314 = vcmask 123904
    %315 = vst.msk [vmem:[#allocation11] sm:$0x3] %vm314, %v312
    // Predicated region
    $region50: #{tpu_custom_call.1} parent=1 // pred_check
      _
    $region51: #{tpu_custom_call.1} parent=1 // pred_check_branch
      %317 = sbr.rel (0) target = $region53
    $region52: #{tpu_custom_call.1} parent=1 // pred_region
      %319 = vsyncadd [#allocation4], 0
      %s321 = sshll.u32 [#allocation11], 4
      %s322 = int_to_ptr.vmem [resolvable:$true] %s321
      %s323 = sshll.u32 %s7, 4
      %s324 = int_to_ptr.hbm [resolvable:$true] %s323
      %326 = dma.vmem_to_hbm [thread:$0]  %s322, 32, %s324, [#allocation4]
    $region53: #{tpu_custom_call.1} parent=1 // pred_fallthru
      _
    // Predicated region
    $region54: #{tpu_custom_call.1} parent=1 // pred_check
      _
    $region55: #{tpu_custom_call.1} parent=1 // pred_check_branch
      %328 = sbr.rel (0) target = $region57
    $region56: #{tpu_custom_call.1} parent=1 // pred_region
      %330 = dma.done [#allocation4], 32
    $region57: #{tpu_custom_call.1} parent=1 // pred_fallthru
      _
    %331 = vsyncpa [#allocation3], 1
    %332 = vsyncpa [#allocation6], 1
    %333 = vsyncpa [#allocation9], 1
    %334 = vsyncpa [#allocation4], 1

</llo_original>
